<compile_context>
chip_gen: v7x
topology: tpu7x:2x2x1
jax: 0.10.0
libtpu: 0.0.40
codegen_flags: <defaults>
</compile_context>

<pallas_src>
import jax
import jax.numpy as jnp
from jax.experimental import pallas as pl
from jax.experimental.pallas import tpu as pltpu


_LANE = 128           # lane granule (last dim)
_SUB_BF16 = 16        # bf16 sublane granule (two rows per sublane)


def _round_up(x, m):
    return ((x + m - 1) // m) * m


def _pick_tile(extent, target, granule):
    """Largest multiple of `granule` <= target whose padded extent stays within
    ~12.5% of the minimal (granule-rounded) extent.  Avoids the previous
    clamp-then-round-up blowup (e.g. M=260, tm=256 -> Mp=512)."""
    eg = _round_up(extent, granule)
    if eg <= target:
        return eg
    target = max(granule, (target // granule) * granule)
    limit = eg + max(eg // 8, granule)
    for t in range(target, granule - 1, -granule):
        if _round_up(eg, t) <= limit:
            return t
    return granule


def _ensure_two_col_blocks(extent_p, t, granule=_LANE):
    """Prefer >= 2 column blocks so both v7x TensorCores get 'parallel' work.
    No-op when the extent is too small; harmless on single-TC v5e/v6e."""
    if extent_p // t >= 2 or extent_p < 2 * granule:
        return t
    start = (extent_p // 2) // granule * granule
    for cand in range(start, granule - 1, -granule):
        if extent_p % cand == 0:
            return cand
    return t


def _vmem_capacity_bytes():
    """Per-core VMEM capacity; conservative 64 MiB (v7x) fallback."""
    try:
        info = pltpu.get_tpu_info()
        cap = getattr(info, "vmem_capacity_bytes", None)
        if cap:
            return max(int(cap), 32 * 1024 * 1024)
    except Exception:
        pass
    return 64 * 1024 * 1024


# ---------------------------------------------------------------------------
# Pallas kernel: tiled matmul + bias, f32 accumulator, bias folded into init.
# ---------------------------------------------------------------------------
def _linear_kernel(x_ref, w_ref, b_ref, o_ref, acc_ref):
    k = pl.program_id(2)

    @pl.when(k == 0)
    def _():
        # Fold the bias into the accumulator init (one broadcast, no extra
        # post-matmul VPU pass over the (tm, tn) tile).
        acc_ref[...] = jnp.broadcast_to(b_ref[...], acc_ref.shape).astype(jnp.float32)

    # bf16 x bf16 -> f32 on the MXU.  The cast is a no-op when x was fed as
    # bf16; when x arrives as f32 it is cast on the VPU, hidden under MXU work.
    acc_ref[...] += jnp.dot(x_ref[...].astype(jnp.bfloat16), w_ref[...],
                            preferred_element_type=jnp.float32)

    @pl.when(k == pl.num_programs(2) - 1)
    def _():
        o_ref[...] = acc_ref[...].astype(o_ref.dtype)


def pallas_linear(x, wp, bp, n_out, *, tn, tk, tm_target=256, out_dtype=None):
    """y = x @ w + b with pre-padded bf16 weights `wp` (Kp, Np) and f32 bias
    `bp` (1, Np).  x: (M, K).  Returns (M, n_out) in `out_dtype` (default
    x.dtype).  Padded M rows / N cols are sliced off; padded K is zero-filled
    so it contributes nothing."""
    M, K = x.shape
    Kp, Np = wp.shape
    assert bp.shape == (1, Np)
    assert K <= Kp and n_out <= Np
    out_dtype = out_dtype or x.dtype

    # M tile: multiple of 16 (bf16 sublane packing).
    tm = _pick_tile(M, tm_target, _SUB_BF16)
    Mp = _round_up(_round_up(M, _SUB_BF16), tm)

    # Pad/cast x only when required (perf review: no identity pre-pass).
    if Mp != M or Kp != K:
        xp = jnp.pad(x.astype(jnp.bfloat16), ((0, Mp - M), (0, Kp - K)))
    else:
        xp = x

    grid = (Mp // tm, Np // tn, Kp // tk)

    # VMEM budget: double-buffered x / w / bias / out tiles + f32 accumulator,
    # with 2x headroom, capped below the chip's per-core VMEM capacity.
    x_bytes = jnp.dtype(xp.dtype).itemsize
    out_bytes = jnp.dtype(out_dtype).itemsize
    vmem_bytes = (
        2 * tm * tk * x_bytes      # x tiles, double-buffered
        + 2 * tk * tn * 2          # bf16 w tiles, double-buffered
        + 2 * tn * 4               # f32 bias tile, double-buffered
        + 2 * tm * tn * out_bytes  # output tile, double-buffered
        + tm * tn * 4              # f32 accumulator scratch
    )
    cap = _vmem_capacity_bytes()
    vmem_limit = int(min(max(2 * vmem_bytes, 16 * 1024 * 1024),
                         cap - 8 * 1024 * 1024))
    vmem_limit = max(vmem_limit, 8 * 1024 * 1024)

    flops = 2 * Mp * Np * Kp
    bytes_accessed = (Mp * Kp * x_bytes + Kp * Np * 2 + Np * 4
                      + Mp * Np * out_bytes)

    out_p = pl.pallas_call(
        _linear_kernel,
        out_shape=jax.ShapeDtypeStruct((Mp, Np), out_dtype),
        grid_spec=pltpu.PrefetchScalarGridSpec(
            num_scalar_prefetch=0,
            grid=grid,
            in_specs=[
                pl.BlockSpec((tm, tk), lambda i, j, k: (i, k)),   # x tile
                pl.BlockSpec((tk, tn), lambda i, j, k: (k, j)),   # w tile
                pl.BlockSpec((1, tn), lambda i, j, k: (0, j)),    # bias: const across K
            ],
            out_specs=pl.BlockSpec((tm, tn), lambda i, j, k: (i, j)),
            scratch_shapes=[pltpu.VMEM((tm, tn), jnp.float32)],
        ),
        compiler_params=pltpu.CompilerParams(
            dimension_semantics=("parallel", "parallel", "arbitrary"),
            vmem_limit_bytes=vmem_limit,
        ),
        cost_estimate=pl.CostEstimate(flops=flops, transcendentals=0,
                                      bytes_accessed=bytes_accessed),
    )(xp, wp, bp)

    if Mp != M or Np != n_out:
        out_p = out_p[:M, :n_out]
    return out_p


# ---------------------------------------------------------------------------
# The wrapped "module": a deterministic Linear whose forward is the Pallas op.
# Weight/bias cast + pad happen ONCE here (cached), not per forward call.
# ---------------------------------------------------------------------------
class PallasLinearModule:
    def __init__(self, d_in, d_out, key, *, tn_target=512, tk_target=1024):
        kw, kb = jax.random.split(key)
        bound = 1.0 / jnp.sqrt(jnp.float32(d_in))
        self.w = jax.random.uniform(kw, (d_in, d_out), jnp.float32, -bound, bound)
        self.b = jax.random.uniform(kb, (d_out,), jnp.float32, -bound, bound)
        self.n = d_out

        # Tile plan for the weight dimensions (known at init).
        self.tk = _pick_tile(d_in, tk_target, _LANE)
        kp = _round_up(_round_up(d_in, _LANE), self.tk)
        tn = _pick_tile(d_out, tn_target, _LANE)
        np_ = _round_up(_round_up(d_out, _LANE), tn)
        self.tn = _ensure_two_col_blocks(np_, tn)

        # Cached padded bf16 weights (lane-dense) and f32 bias (K-pad is zero,
        # so any padded-K activation columns contribute exactly 0).
        self.wp = jnp.pad(self.w.astype(jnp.bfloat16),
                          ((0, kp - d_in), (0, np_ - d_out)))
        self.bp = jnp.pad(self.b.astype(jnp.float32), (0, np_ - d_out)).reshape(1, np_)

    def __call__(self, x):
        return pallas_linear(x, self.wp, self.bp, self.n, tn=self.tn, tk=self.tk)


# ---------------------------------------------------------------------------
# NullDDP: exact analogue of the PyTorch wrapper — forward delegates verbatim.
# ---------------------------------------------------------------------------
class NullDDP:
    def __init__(self, module, *args, **kwargs):
        self.module = module
        # DDP training flag; no effect on forward (kept for fidelity).
        # TODO(synk): backward gradient-sync semantics are training-only and
        # intentionally not modeled here.
        self.require_backward_grad_sync = False

    def __call__(self, *args, **kwargs):
        # forward(*args, **kwargs) -> self.module(*args, **kwargs)
        return self.module(*args, **kwargs)


if __name__ == "__main__":
    key = jax.random.PRNGKey(0)
    k_param, k_x = jax.random.split(key)

    # Small but lane-dense shapes: hidden=128 keeps the output last dim a
    # multiple of 128 (unmasked stores) while remaining a toy problem.
    batch, hidden = 8, 128
    inner = PallasLinearModule(hidden, hidden, k_param)
    model = NullDDP(inner)

    x = jax.random.normal(k_x, (batch, hidden), jnp.float32)

    y = jax.block_until_ready(model(x))          # NullDDP delegation -> Pallas kernel
    y_inner = jax.block_until_ready(inner(x))

    # NullDDP output must equal the wrapped module's output exactly.
    assert y.shape == (batch, hidden)
    assert bool(jnp.array_equal(y, y_inner))

    # Numerical sanity vs. a pure-JAX bf16-operand / f32-accumulate reference.
    ref = jnp.dot(x.astype(jnp.bfloat16), inner.w.astype(jnp.bfloat16),
                  preferred_element_type=jnp.float32) + inner.b
    assert bool(jnp.allclose(y, ref, rtol=1e-2, atol=1e-2))

    print("KERNEL_OK")
</pallas_src>

<mosaic_0001>
module attributes {stable_mosaic.version = 11 : i64} {
  func.func @_linear_kernel(%arg0: i32, %arg1: i32, %arg2: i32, %arg3: memref<16x128xbf16, #tpu.memory_space<vmem>>, %arg4: memref<128x128xbf16, #tpu.memory_space<vmem>>, %arg5: memref<1x128xf32, #tpu.memory_space<vmem>>, %arg6: memref<16x128xf32, #tpu.memory_space<vmem>>, %arg7: memref<16x128xf32, #tpu.memory_space<vmem>>) attributes {dimension_semantics = [#tpu.dimension_semantics<parallel>, #tpu.dimension_semantics<parallel>, #tpu.dimension_semantics<arbitrary>], iteration_bounds = array<i64: 1, 1, 1>, scalar_prefetch = 0 : i64, scratch_operands = 1 : i64, tpu.core_type = #tpu.core_type<tc>, window_params = [{transform_indices = @transform_0, window_bounds = array<i64: 16, 128>}, {transform_indices = @transform_1, window_bounds = array<i64: 128, 128>}, {transform_indices = @transform_2, window_bounds = array<i64: 1, 128>}, {transform_indices = @transform_3, window_bounds = array<i64: 16, 128>}]} {
    %c0_i32 = arith.constant 0 : i32
    %0 = arith.cmpi eq, %arg2, %c0_i32 : i32
    %1 = arith.extui %0 : i1 to i32
    %c0_i32_0 = arith.constant 0 : i32
    %2 = arith.cmpi ne, %1, %c0_i32_0 : i32
    scf.if %2 {
      %c0_10 = arith.constant 0 : index
      %c0_11 = arith.constant 0 : index
      %12 = vector.load %arg5[%c0_10, %c0_11] : memref<1x128xf32, #tpu.memory_space<vmem>>, vector<1x128xf32>
      %13 = vector.shape_cast %12 : vector<1x128xf32> to vector<1x128xf32>
      %14 = vector.broadcast %13 : vector<1x128xf32> to vector<16x128xf32>
      %c0_12 = arith.constant 0 : index
      %c0_13 = arith.constant 0 : index
      %15 = vector.load %arg7[%c0_12, %c0_13] : memref<16x128xf32, #tpu.memory_space<vmem>>, vector<16x128xf32>
      tpu.vector_store %arg7[%c0_12, %c0_13], %14 {strides = array<i32>} : memref<16x128xf32, #tpu.memory_space<vmem>>, vector<16x128xf32>,
    } else {
    }
    %c0 = arith.constant 0 : index
    %c0_1 = arith.constant 0 : index
    %3 = vector.load %arg7[%c0, %c0_1] : memref<16x128xf32, #tpu.memory_space<vmem>>, vector<16x128xf32>
    %c0_2 = arith.constant 0 : index
    %c0_3 = arith.constant 0 : index
    %4 = vector.load %arg3[%c0_2, %c0_3] : memref<16x128xbf16, #tpu.memory_space<vmem>>, vector<16x128xbf16>
    %c0_4 = arith.constant 0 : index
    %c0_5 = arith.constant 0 : index
    %5 = vector.load %arg4[%c0_4, %c0_5] : memref<128x128xbf16, #tpu.memory_space<vmem>>, vector<128x128xbf16>
    %cst = arith.constant dense<0.000000e+00> : vector<16x128xf32>
    %6 = tpu.matmul %4, %5, %cst {dimension_numbers = #tpu.dot_dimension_numbers<[1], [0], [0], [1], [0, 0, 1, 1], [], []>} : vector<16x128xbf16>, vector<128x128xbf16>, vector<16x128xf32> -> vector<16x128xf32>
    %7 = arith.addf %3, %6 : vector<16x128xf32>
    %c0_6 = arith.constant 0 : index
    %c0_7 = arith.constant 0 : index
    %8 = vector.load %arg7[%c0_6, %c0_7] : memref<16x128xf32, #tpu.memory_space<vmem>>, vector<16x128xf32>
    tpu.vector_store %arg7[%c0_6, %c0_7], %7 {strides = array<i32>} : memref<16x128xf32, #tpu.memory_space<vmem>>, vector<16x128xf32>,
    %c0_i32_8 = arith.constant 0 : i32
    %9 = arith.cmpi eq, %arg2, %c0_i32_8 : i32
    %10 = arith.extui %9 : i1 to i32
    %c0_i32_9 = arith.constant 0 : i32
    %11 = arith.cmpi ne, %10, %c0_i32_9 : i32
    scf.if %11 {
      %c0_10 = arith.constant 0 : index
      %c0_11 = arith.constant 0 : index
      %12 = vector.load %arg7[%c0_10, %c0_11] : memref<16x128xf32, #tpu.memory_space<vmem>>, vector<16x128xf32>
      %c0_12 = arith.constant 0 : index
      %c0_13 = arith.constant 0 : index
      %13 = vector.load %arg6[%c0_12, %c0_13] : memref<16x128xf32, #tpu.memory_space<vmem>>, vector<16x128xf32>
      tpu.vector_store %arg6[%c0_12, %c0_13], %12 {strides = array<i32>} : memref<16x128xf32, #tpu.memory_space<vmem>>, vector<16x128xf32>,
    } else {
    }
    return
  }
  func.func @transform_0(%arg0: i32, %arg1: i32, %arg2: i32) -> (i32, i32) {
    %c0_i32 = arith.constant 0 : i32
    return %arg0, %arg2 : i32, i32
  }
  func.func @transform_1(%arg0: i32, %arg1: i32, %arg2: i32) -> (i32, i32) {
    %c0_i32 = arith.constant 0 : i32
    return %arg2, %arg1 : i32, i32
  }
  func.func @transform_2(%arg0: i32, %arg1: i32, %arg2: i32) -> (i32, i32) {
    %c0_i32 = arith.constant 0 : i32
    %c0_i32_0 = arith.constant 0 : i32
    return %c0_i32, %arg1 : i32, i32
  }
  func.func @transform_3(%arg0: i32, %arg1: i32, %arg2: i32) -> (i32, i32) {
    %c0_i32 = arith.constant 0 : i32
    return %arg0, %arg1 : i32, i32
  }
}

</mosaic_0001>

<llo_original>
// kernel: tpu_custom_call.1
$region0: #{tpu_custom_call.1}
  #allocation0 [shape = 'u32[]', space=smem, size = 0x4, offset = 0x4, fixed_abs, tag = 'smem constant byte address 0x4 - core index']
  #allocation1 [shape = 'u32[144,128]{1,0:T(1,128)}', space=vmem, size = 0x12000, scoped, tag = 'internal scratch']
  #allocation2 [shape = 'f32[16,128]{1,0:T(8,128)}', space=vmem, size = 0x2000, scoped, tag = 'scratch operand']
  %s0 = inlined_call_operand.hbm [shape: bf16[16,128], index: 0, kind: input, shape index: {}]
  %s1 = inlined_call_operand.hbm [shape: bf16[128,128], index: 1, kind: input, shape index: {}]
  %s2 = inlined_call_operand.vmem [shape: f32[1,128], index: 2, kind: input, shape index: {}]
  %s3 = inlined_call_operand.hbm [shape: f32[16,128], index: 3, kind: output, shape index: {}]
  %s4 = sld [smem:[#allocation0]]
  $region38: #{tpu_custom_call.1} parent=0
    _
  %s6 = ssub.s32 1, %s4
  %s7 = scalar_select 0, %s6, %s4
  $region1: #{tpu_custom_call.1} parent=0
    #allocation3 [shape = 'u8[4096]{0}', space=vmem, size = 0x1000, scoped, tag = 'input window, operand 0, single buffered']
    #allocation4 [shape = 's32[1]{0}', space=sflag, size = 0x4, scoped, tag = 'scoped memory for tpu_custom_call.1']
    #allocation5 [shape = 's32[1]{0}', space=sflag, size = 0x4, scoped, tag = 'scoped memory for tpu_custom_call.1']
    #allocation6 [shape = 'u8[32768]{0}', space=vmem, size = 0x8000, scoped, tag = 'input window, operand 1, single buffered']
    #allocation7 [shape = 's32[1]{0}', space=sflag, size = 0x4, scoped, tag = 'scoped memory for tpu_custom_call.1']
    #allocation8 [shape = 'u8[8192]{0}', space=vmem, size = 0x2000, scoped, tag = 'output window, operand 0, single buffered']
    %8 = vsyncpa [#allocation4], 0
    %9 = vsyncpa [#allocation7], 0
    %10 = vsyncpa [#allocation5], 0
    // Predicated region
    $region2: #{tpu_custom_call.1} parent=1 // pred_check
      _
    $region3: #{tpu_custom_call.1} parent=1 // pred_check_branch
      %12 = sbr.rel (0) target = $region5
    $region4: #{tpu_custom_call.1} parent=1 // pred_region
      %s14 = ssub.s32 128, 128
      %15 = vsyncadd [#allocation4], %s14
      %s16 = sshll.u32 [#allocation3], 4
      %s17 = int_to_ptr.vmem [resolvable:$true] %s16
      %22 = dma.hbm_to_vmem [thread:$0]  %s0, 128, %s17, [#allocation4], 64, 64, 4
    $region5: #{tpu_custom_call.1} parent=1 // pred_fallthru
      _
    // Predicated region
    $region6: #{tpu_custom_call.1} parent=1 // pred_check
      _
    $region7: #{tpu_custom_call.1} parent=1 // pred_check_branch
      %24 = sbr.rel (0) target = $region9
    $region8: #{tpu_custom_call.1} parent=1 // pred_region
      %s26 = ssub.s32 1024, 1024
      %27 = vsyncadd [#allocation7], %s26
      %s28 = sshll.u32 [#allocation6], 4
      %s29 = int_to_ptr.vmem [resolvable:$true] %s28
      %34 = dma.hbm_to_vmem [thread:$0]  %s1, 1024, %s29, [#allocation7], 64, 64, 4
    $region9: #{tpu_custom_call.1} parent=1 // pred_fallthru
      _
    // Predicated region
    $region10: #{tpu_custom_call.1} parent=1 // pred_check
      _
    $region11: #{tpu_custom_call.1} parent=1 // pred_check_branch
      %36 = sbr.rel (0) target = $region13
    $region12: #{tpu_custom_call.1} parent=1 // pred_region
      _
    $region13: #{tpu_custom_call.1} parent=1 // pred_fallthru
      _
    // Predicated region
    $region14: #{tpu_custom_call.1} parent=1 // pred_check
      _
    $region15: #{tpu_custom_call.1} parent=1 // pred_check_branch
      %38 = sbr.rel (0) target = $region17
    $region16: #{tpu_custom_call.1} parent=1 // pred_region
      %39 = dma.done [#allocation4], 128
    $region17: #{tpu_custom_call.1} parent=1 // pred_fallthru
      _
    // Predicated region
    $region18: #{tpu_custom_call.1} parent=1 // pred_check
      _
    $region19: #{tpu_custom_call.1} parent=1 // pred_check_branch
      %41 = sbr.rel (0) target = $region21
    $region20: #{tpu_custom_call.1} parent=1 // pred_region
      %42 = dma.done [#allocation7], 1024
    $region21: #{tpu_custom_call.1} parent=1 // pred_fallthru
      _
    %p44 = scmp.eq.s32.totalorder 0, 0
    // Predicated region
    $region22: #{tpu_custom_call.1} parent=1 // pred_check
      %p45 = pneg %p44
    $region23: #{tpu_custom_call.1} parent=1 // pred_check_branch
      %47 = sbr.rel (%p45) target = $region25
    $region24: #{tpu_custom_call.1} parent=1 // pred_region
      %v48 = vld [vmem:[%s2] sm:$0x1]
      %v50 = vlaneseq
      %v51 = vshrl.u32 %v50, 7
      %v52 = vsub.s32 0, %v51
      %v53 = vrot.slane %v48, %v52
      %55 = vst [vmem:[#allocation2] sm:$0xff] %v53
      %56 = vst [vmem:[#allocation2 + $0x8] sm:$0xff] %v53
    $region25: #{tpu_custom_call.1} parent=1 // pred_fallthru
      _
    %v57 = vld [vmem:[#allocation2] sm:$0xff]
    %v58 = vld [vmem:[#allocation2 + $0x8] sm:$0xff]
    %v59 = vld [vmem:[#allocation3] sm:$0xf]
    %v60 = vld [vmem:[#allocation3 + $0x4] sm:$0xf]
    %v61 = vld [vmem:[#allocation6] sm:$0xf]
    %v62 = vld [vmem:[#allocation6 + $0x4] sm:$0xf]
    %v63 = vld [vmem:[#allocation6 + $0x8] sm:$0xf]
    %v64 = vld [vmem:[#allocation6 + $0xc] sm:$0xf]
    %v65 = vld [vmem:[#allocation6 + $0x10] sm:$0xf]
    %v66 = vld [vmem:[#allocation6 + $0x14] sm:$0xf]
    %v67 = vld [vmem:[#allocation6 + $0x18] sm:$0xf]
    %v68 = vld [vmem:[#allocation6 + $0x1c] sm:$0xf]
    %v69 = vld [vmem:[#allocation6 + $0x20] sm:$0xf]
    %v70 = vld [vmem:[#allocation6 + $0x24] sm:$0xf]
    %v71 = vld [vmem:[#allocation6 + $0x28] sm:$0xf]
    %v72 = vld [vmem:[#allocation6 + $0x2c] sm:$0xf]
    %v73 = vld [vmem:[#allocation6 + $0x30] sm:$0xf]
    %v74 = vld [vmem:[#allocation6 + $0x34] sm:$0xf]
    %v75 = vld [vmem:[#allocation6 + $0x38] sm:$0xf]
    %v76 = vld [vmem:[#allocation6 + $0x3c] sm:$0xf]
    %v79 = vunpack.c.l.b16 %v59
    %v80 = vunpack.c.l.b16 %v60
    %v81 = vpack.c.b16 %v80, %v79
    %v99 = vunpack.c.l.b16 %v61
    %v100 = vunpack.c.l.b16 %v62
    %v101 = vunpack.c.l.b16 %v63
    %v102 = vunpack.c.l.b16 %v64
    %v103 = vunpack.c.l.b16 %v65
    %v104 = vunpack.c.l.b16 %v66
    %v105 = vunpack.c.l.b16 %v67
    %v106 = vunpack.c.l.b16 %v68
    %v107 = vunpack.c.l.b16 %v69
    %v108 = vunpack.c.l.b16 %v70
    %v109 = vunpack.c.l.b16 %v71
    %v110 = vunpack.c.l.b16 %v72
    %v111 = vunpack.c.l.b16 %v73
    %v112 = vunpack.c.l.b16 %v74
    %v113 = vunpack.c.l.b16 %v75
    %v114 = vunpack.c.l.b16 %v76
    %v115 = vpack.c.b16 %v100, %v99
    %v116 = vpack.c.b16 %v102, %v101
    %v117 = vpack.c.b16 %v104, %v103
    %v118 = vpack.c.b16 %v106, %v105
    %v119 = vpack.c.b16 %v108, %v107
    %v120 = vpack.c.b16 %v110, %v109
    %v121 = vpack.c.b16 %v112, %v111
    %v122 = vpack.c.b16 %v114, %v113
    %131 = vmatprep.subr.bf16.mxu0 0
    %132 = vmatpush1.bf16.msra.mxu0 %v115
    %133 = vmatprep.subr.bf16.mxu0 0
    %134 = vmatpush1.bf16.msra.mxu0 %v116
    %135 = vmatprep.subr.bf16.mxu0 0
    %136 = vmatpush1.bf16.msra.mxu0 %v117
    %137 = vmatprep.subr.bf16.mxu0 0
    %138 = vmatpush1.bf16.msra.mxu0 %v118
    %139 = vmatprep.subr.bf16.mxu0 0
    %140 = vmatpush1.bf16.msra.mxu0 %v119
    %141 = vmatprep.subr.bf16.mxu0 0
    %142 = vmatpush1.bf16.msra.mxu0 %v120
    %143 = vmatprep.subr.bf16.mxu0 0
    %144 = vmatpush1.bf16.msra.mxu0 %v121
    %145 = vmatprep.subr.bf16.mxu0 0
    %146 = vmatpush1.bf16.msra.mxu0 %v122
    %147 = vmatprep.subr.bf16.mxu0 0
    %148 = vmatpush1.bf16.msra.mxu0 0
    %149 = vmatprep.subr.bf16.mxu0 0
    %150 = vmatpush1.bf16.msra.mxu0 0
    %151 = vmatprep.subr.bf16.mxu0 0
    %152 = vmatpush1.bf16.msra.mxu0 0
    %153 = vmatprep.subr.bf16.mxu0 0
    %154 = vmatpush1.bf16.msra.mxu0 0
    %155 = vmatprep.subr.bf16.mxu0 0
    %156 = vmatpush1.bf16.msra.mxu0 0
    %157 = vmatprep.subr.bf16.mxu0 0
    %158 = vmatpush1.bf16.msra.mxu0 0
    %159 = vmatprep.subr.bf16.mxu0 0
    %160 = vmatpush1.bf16.msra.mxu0 0
    %161 = vmatprep.subr.bf16.mxu0 0
    %162 = vmatpush1.bf16.msra.mxu0 0
    %163 = vmatprep.mubr.bf16.mxu0 0
    %164 = vmatmul.mubr.bf16.gmra.mrb[0].mxu0 %v81
    %v165 = vpop.f32.mrb[0].mxu0
    %v166 = vadd.f32 0.0, %v165
    %v167 = vpop.f32.mrb[0].mxu0
    %v168 = vpop.f32.mrb[0].mxu0
    %v169 = vadd.f32 0.0, %v168
    %v170 = vpop.f32.mrb[0].mxu0
    %171 = vdwg.mxu0
    %v172 = vadd.f32 %v57, %v166
    %v173 = vadd.f32 %v58, %v169
    %174 = vst [vmem:[#allocation2] sm:$0xff] %v172
    %175 = vst [vmem:[#allocation2 + $0x8] sm:$0xff] %v173
    // Predicated region
    $region26: #{tpu_custom_call.1} parent=1 // pred_check
      %p176 = pneg %p44
    $region27: #{tpu_custom_call.1} parent=1 // pred_check_branch
      %178 = sbr.rel (%p176) target = $region29
    $region28: #{tpu_custom_call.1} parent=1 // pred_region
      %v179 = vld [vmem:[#allocation2] sm:$0xff]
      %v180 = vld [vmem:[#allocation2 + $0x8] sm:$0xff]
      %181 = vst [vmem:[#allocation8] sm:$0xff] %v179
      %182 = vst [vmem:[#allocation8 + $0x8] sm:$0xff] %v180
    $region29: #{tpu_custom_call.1} parent=1 // pred_fallthru
      _
    // Predicated region
    $region30: #{tpu_custom_call.1} parent=1 // pred_check
      _
    $region31: #{tpu_custom_call.1} parent=1 // pred_check_branch
      %184 = sbr.rel (0) target = $region33
    $region32: #{tpu_custom_call.1} parent=1 // pred_region
      %s186 = ssub.s32 256, 256
      %187 = vsyncadd [#allocation5], %s186
      %s188 = sshll.u32 [#allocation8], 4
      %s189 = int_to_ptr.vmem [resolvable:$true] %s188
      %194 = dma.vmem_to_hbm [thread:$0]  %s189, 256, %s3, [#allocation5], 128, 128, 8
    $region33: #{tpu_custom_call.1} parent=1 // pred_fallthru
      _
    // Predicated region
    $region34: #{tpu_custom_call.1} parent=1 // pred_check
      _
    $region35: #{tpu_custom_call.1} parent=1 // pred_check_branch
      %196 = sbr.rel (0) target = $region37
    $region36: #{tpu_custom_call.1} parent=1 // pred_region
      %197 = dma.done [#allocation5], 256
    $region37: #{tpu_custom_call.1} parent=1 // pred_fallthru
      _
    %198 = vsyncpa [#allocation4], 1
    %199 = vsyncpa [#allocation7], 1
    %200 = vsyncpa [#allocation5], 1

</llo_original>
